<compile_context>
chip_gen: v5e
topology: v5e:2x2
jax: 0.10.0
libtpu: 0.0.40
codegen_flags: <defaults>
</compile_context>

<pallas_src>
import functools

import jax
import jax.numpy as jnp
from jax.experimental import pallas as pl
from jax.experimental.pallas import tpu as pltpu

NUM_CLASSES = 2
SMOOTH = 1e-5
LANES = 128
MAX_TILE_ROWS = 1024   # ~85%+ of HBM roofline at >=512 rows; comfortable VMEM fit
NUM_CORES = 2          # leading "parallel" grid axis (megacore); no-op on 1-TC chips
N_SUMS = 4             # sum(p), sum(p^2), sum(p*t), sum(t)
NEG_PAD = -1e30        # sigmoid(2*NEG_PAD - 1) == 0 exactly -> padding is inert


def _round_up(n, m):
    return ((n + m - 1) // m) * m


def _dice_partial_kernel(x_ref, t_ref, o_ref, *, apply_softmax, tile_rows):
    # Output block is resident across the "arbitrary" axis -> it IS the accumulator.
    @pl.when(pl.program_id(1) == 0)
    def _init():
        o_ref[...] = jnp.zeros_like(o_ref)

    x = x_ref[...]   # (tile_rows, 128) f32: class-1 score / probability
    t = t_ref[...]   # (tile_rows, 128) f32: labels in {0, 1}

    if apply_softmax:
        # softmax over the 2-class axis of [1-x, x]:
        #   p1 = exp(x) / (exp(1-x) + exp(x)) = sigmoid(2x - 1)   (EUP path)
        p = jax.nn.sigmoid(2.0 * x - 1.0)
    else:
        p = x

    def rowsum(v):
        # (tile_rows, 128) -> (8, 128): cross-vreg elementwise adds (pure VPU),
        # no cross-lane reduction per step.
        return v.reshape(tile_rows // 8, 8, LANES).sum(axis=0)

    o_ref[0, 0] += rowsum(p)        # sum(p)
    o_ref[0, 1] += rowsum(p * p)    # sum(p^2)
    o_ref[0, 2] += rowsum(p * t)    # sum(p*t)
    o_ref[0, 3] += rowsum(t)        # sum(t)    (t^2 == t for labels in {0,1})


@functools.partial(jax.jit, static_argnames=("softmax",))
def dice_loss_softmax(inputs, target, softmax=False):
    """Pallas implementation of DiceLoss_softmax.forward(inputs, target, softmax).

    `inputs` holds the class-1 probability/score, `target` holds labels in {0,1}.
    """
    x = inputs.reshape(-1).astype(jnp.float32)
    t = target.reshape(-1).astype(jnp.float32)
    total = x.shape[0]

    rows = pl.cdiv(total, LANES)
    tile_rows = min(MAX_TILE_ROWS, _round_up(max(rows, 1), 8))
    steps_total = pl.cdiv(rows, tile_rows)
    steps_per_core = pl.cdiv(steps_total, NUM_CORES)
    steps_total = steps_per_core * NUM_CORES
    rows_padded = steps_total * tile_rows

    pad = rows_padded * LANES - total
    if pad:
        # TODO(synk): jnp.pad copies the full stream; for perfectly aligned
        # inputs (pad == 0) the kernel consumes the reshaped arrays directly.
        x = jnp.pad(x, (0, pad),
                    constant_values=(NEG_PAD if softmax else 0.0))
        t = jnp.pad(t, (0, pad))
    x = x.reshape(rows_padded, LANES)
    t = t.reshape(rows_padded, LANES)

    kernel = functools.partial(
        _dice_partial_kernel,
        apply_softmax=bool(softmax),
        tile_rows=tile_rows,
    )

    partials = pl.pallas_call(
        kernel,
        out_shape=jax.ShapeDtypeStruct((NUM_CORES, N_SUMS, 8, LANES), jnp.float32),
        grid_spec=pltpu.PrefetchScalarGridSpec(
            num_scalar_prefetch=0,
            grid=(NUM_CORES, steps_per_core),
            in_specs=[
                pl.BlockSpec((tile_rows, LANES),
                             lambda c, i: (c * steps_per_core + i, 0)),
                pl.BlockSpec((tile_rows, LANES),
                             lambda c, i: (c * steps_per_core + i, 0)),
            ],
            out_specs=pl.BlockSpec((1, N_SUMS, 8, LANES),
                                   lambda c, i: (c, 0, 0, 0)),
        ),
        compiler_params=pltpu.CompilerParams(
            dimension_semantics=("parallel", "arbitrary"),
        ),
    )(x, t)

    # Tiny epilogue: one cross-lane/core reduction + the scalar dice formula.
    sums = jnp.sum(partials, axis=(0, 2, 3))          # (4,)
    s_p, s_pp, s_pt, s_t = sums[0], sums[1], sums[2], sums[3]
    n = jnp.float32(total)

    # class 1: score = p, target = t
    d1 = 1.0 - (2.0 * s_pt + SMOOTH) / (s_pp + s_t + SMOOTH)
    # class 0: score = 1-p, target = 1-t  (derived algebraically; t in {0,1})
    inter0 = n - s_p - s_t + s_pt
    z0 = n - 2.0 * s_p + s_pp
    y0 = n - s_t
    d0 = 1.0 - (2.0 * inter0 + SMOOTH) / (z0 + y0 + SMOOTH)

    return d0 + d1   # the PyTorch module sums (does not average) over classes


def _reference(inputs, target, softmax=False):
    """Plain-JAX transcription of the PyTorch forward."""
    x = inputs.reshape(-1)[:, None].astype(jnp.float32)
    x = jnp.concatenate([1.0 - x, x], axis=1)
    if softmax:
        x = jax.nn.softmax(x, axis=1)
    t = target.reshape(-1)
    tgt = jnp.stack([(t == 0), (t == 1)], axis=1).astype(jnp.float32)
    loss = 0.0
    for i in range(NUM_CLASSES):
        s, tt = x[:, i], tgt[:, i]
        inter = jnp.sum(s * tt)
        y_sum = jnp.sum(tt * tt)
        z_sum = jnp.sum(s * s)
        loss += 1.0 - (2.0 * inter + SMOOTH) / (z_sum + y_sum + SMOOTH)
    return loss


if __name__ == "__main__":
    key = jax.random.PRNGKey(0)
    k1, k2 = jax.random.split(key)
    B, H, W = 2, 16, 16
    inputs = jax.random.uniform(k1, (B, H, W), dtype=jnp.float32)
    target = jax.random.randint(k2, (B, H, W), 0, NUM_CLASSES).astype(jnp.float32)

    # softmax=False path
    loss = jax.block_until_ready(dice_loss_softmax(inputs, target, softmax=False))
    expected = _reference(inputs, target, softmax=False)
    assert abs(float(loss) - float(expected)) < 1e-4, (float(loss), float(expected))

    # softmax=True path (exercises the inert -1e30 padding)
    loss_sm = jax.block_until_ready(dice_loss_softmax(inputs, target, softmax=True))
    expected_sm = _reference(inputs, target, softmax=True)
    assert abs(float(loss_sm) - float(expected_sm)) < 1e-4, (
        float(loss_sm), float(expected_sm))

    print("KERNEL_OK")
</pallas_src>

<mosaic_0001>
module attributes {stable_mosaic.version = 11 : i64} {
  func.func @_dice_partial_kernel(%arg0: i32, %arg1: i32, %arg2: memref<8x128xf32, #tpu.memory_space<vmem>>, %arg3: memref<8x128xf32, #tpu.memory_space<vmem>>, %arg4: memref<1x4x8x128xf32, #tpu.memory_space<vmem>>) attributes {dimension_semantics = [#tpu.dimension_semantics<parallel>, #tpu.dimension_semantics<arbitrary>], iteration_bounds = array<i64: 2, 1>, scalar_prefetch = 0 : i64, scratch_operands = 0 : i64, tpu.core_type = #tpu.core_type<tc>, window_params = [{transform_indices = @transform_0, window_bounds = array<i64: 8, 128>}, {transform_indices = @transform_1, window_bounds = array<i64: 8, 128>}, {transform_indices = @transform_2, window_bounds = array<i64: 1, 4, 8, 128>}]} {
    %c0_i32 = arith.constant 0 : i32
    %0 = arith.cmpi eq, %arg1, %c0_i32 : i32
    %1 = arith.extui %0 : i1 to i32
    %c0_i32_0 = arith.constant 0 : i32
    %2 = arith.cmpi ne, %1, %c0_i32_0 : i32
    scf.if %2 {
      %cst_36 = arith.constant 0.000000e+00 : f32
      %39 = vector.broadcast %cst_36 : f32 to vector<1x4x8x128xf32>
      %c0_37 = arith.constant 0 : index
      %c0_38 = arith.constant 0 : index
      %c0_39 = arith.constant 0 : index
      %c0_40 = arith.constant 0 : index
      %40 = vector.load %arg4[%c0_37, %c0_38, %c0_39, %c0_40] : memref<1x4x8x128xf32, #tpu.memory_space<vmem>>, vector<1x4x8x128xf32>
      tpu.vector_store %arg4[%c0_37, %c0_38, %c0_39, %c0_40], %39 {strides = array<i32>} : memref<1x4x8x128xf32, #tpu.memory_space<vmem>>, vector<1x4x8x128xf32>,
    } else {
    }
    %c0 = arith.constant 0 : index
    %c0_1 = arith.constant 0 : index
    %3 = vector.load %arg2[%c0, %c0_1] : memref<8x128xf32, #tpu.memory_space<vmem>>, vector<8x128xf32>
    %c0_2 = arith.constant 0 : index
    %c0_3 = arith.constant 0 : index
    %4 = vector.load %arg3[%c0_2, %c0_3] : memref<8x128xf32, #tpu.memory_space<vmem>>, vector<8x128xf32>
    %c0_4 = arith.constant 0 : index
    %c0_5 = arith.constant 0 : index
    %c0_6 = arith.constant 0 : index
    %c0_7 = arith.constant 0 : index
    %5 = vector.load %arg4[%c0_4, %c0_5, %c0_6, %c0_7] : memref<1x4x8x128xf32, #tpu.memory_space<vmem>>, vector<1x1x8x128xf32>
    %6 = vector.shape_cast %5 : vector<1x1x8x128xf32> to vector<8x128xf32>
    %7 = vector.shape_cast %3 : vector<8x128xf32> to vector<1x8x128xf32>
    %cst = arith.constant dense<0.000000e+00> : vector<8x128xf32>
    %8 = vector.multi_reduction <add>, %7, %cst [0] : vector<1x8x128xf32> to vector<8x128xf32>
    %9 = arith.addf %6, %8 : vector<8x128xf32>
    %c0_8 = arith.constant 0 : index
    %c0_9 = arith.constant 0 : index
    %c0_10 = arith.constant 0 : index
    %c0_11 = arith.constant 0 : index
    %10 = vector.load %arg4[%c0_8, %c0_9, %c0_10, %c0_11] : memref<1x4x8x128xf32, #tpu.memory_space<vmem>>, vector<1x1x8x128xf32>
    %11 = vector.shape_cast %10 : vector<1x1x8x128xf32> to vector<8x128xf32>
    %12 = vector.shape_cast %9 : vector<8x128xf32> to vector<1x1x8x128xf32>
    tpu.vector_store %arg4[%c0_8, %c0_9, %c0_10, %c0_11], %12 {strides = array<i32>} : memref<1x4x8x128xf32, #tpu.memory_space<vmem>>, vector<1x1x8x128xf32>,
    %c0_12 = arith.constant 0 : index
    %c1 = arith.constant 1 : index
    %c0_13 = arith.constant 0 : index
    %c0_14 = arith.constant 0 : index
    %13 = vector.load %arg4[%c0_12, %c1, %c0_13, %c0_14] : memref<1x4x8x128xf32, #tpu.memory_space<vmem>>, vector<1x1x8x128xf32>
    %14 = vector.shape_cast %13 : vector<1x1x8x128xf32> to vector<8x128xf32>
    %15 = arith.mulf %3, %3 : vector<8x128xf32>
    %16 = vector.shape_cast %15 : vector<8x128xf32> to vector<1x8x128xf32>
    %cst_15 = arith.constant dense<0.000000e+00> : vector<8x128xf32>
    %17 = vector.multi_reduction <add>, %16, %cst_15 [0] : vector<1x8x128xf32> to vector<8x128xf32>
    %18 = arith.addf %14, %17 : vector<8x128xf32>
    %c0_16 = arith.constant 0 : index
    %c1_17 = arith.constant 1 : index
    %c0_18 = arith.constant 0 : index
    %c0_19 = arith.constant 0 : index
    %19 = vector.load %arg4[%c0_16, %c1_17, %c0_18, %c0_19] : memref<1x4x8x128xf32, #tpu.memory_space<vmem>>, vector<1x1x8x128xf32>
    %20 = vector.shape_cast %19 : vector<1x1x8x128xf32> to vector<8x128xf32>
    %21 = vector.shape_cast %18 : vector<8x128xf32> to vector<1x1x8x128xf32>
    tpu.vector_store %arg4[%c0_16, %c1_17, %c0_18, %c0_19], %21 {strides = array<i32>} : memref<1x4x8x128xf32, #tpu.memory_space<vmem>>, vector<1x1x8x128xf32>,
    %c0_20 = arith.constant 0 : index
    %c2 = arith.constant 2 : index
    %c0_21 = arith.constant 0 : index
    %c0_22 = arith.constant 0 : index
    %22 = vector.load %arg4[%c0_20, %c2, %c0_21, %c0_22] : memref<1x4x8x128xf32, #tpu.memory_space<vmem>>, vector<1x1x8x128xf32>
    %23 = vector.shape_cast %22 : vector<1x1x8x128xf32> to vector<8x128xf32>
    %24 = arith.mulf %3, %4 : vector<8x128xf32>
    %25 = vector.shape_cast %24 : vector<8x128xf32> to vector<1x8x128xf32>
    %cst_23 = arith.constant dense<0.000000e+00> : vector<8x128xf32>
    %26 = vector.multi_reduction <add>, %25, %cst_23 [0] : vector<1x8x128xf32> to vector<8x128xf32>
    %27 = arith.addf %23, %26 : vector<8x128xf32>
    %c0_24 = arith.constant 0 : index
    %c2_25 = arith.constant 2 : index
    %c0_26 = arith.constant 0 : index
    %c0_27 = arith.constant 0 : index
    %28 = vector.load %arg4[%c0_24, %c2_25, %c0_26, %c0_27] : memref<1x4x8x128xf32, #tpu.memory_space<vmem>>, vector<1x1x8x128xf32>
    %29 = vector.shape_cast %28 : vector<1x1x8x128xf32> to vector<8x128xf32>
    %30 = vector.shape_cast %27 : vector<8x128xf32> to vector<1x1x8x128xf32>
    tpu.vector_store %arg4[%c0_24, %c2_25, %c0_26, %c0_27], %30 {strides = array<i32>} : memref<1x4x8x128xf32, #tpu.memory_space<vmem>>, vector<1x1x8x128xf32>,
    %c0_28 = arith.constant 0 : index
    %c3 = arith.constant 3 : index
    %c0_29 = arith.constant 0 : index
    %c0_30 = arith.constant 0 : index
    %31 = vector.load %arg4[%c0_28, %c3, %c0_29, %c0_30] : memref<1x4x8x128xf32, #tpu.memory_space<vmem>>, vector<1x1x8x128xf32>
    %32 = vector.shape_cast %31 : vector<1x1x8x128xf32> to vector<8x128xf32>
    %33 = vector.shape_cast %4 : vector<8x128xf32> to vector<1x8x128xf32>
    %cst_31 = arith.constant dense<0.000000e+00> : vector<8x128xf32>
    %34 = vector.multi_reduction <add>, %33, %cst_31 [0] : vector<1x8x128xf32> to vector<8x128xf32>
    %35 = arith.addf %32, %34 : vector<8x128xf32>
    %c0_32 = arith.constant 0 : index
    %c3_33 = arith.constant 3 : index
    %c0_34 = arith.constant 0 : index
    %c0_35 = arith.constant 0 : index
    %36 = vector.load %arg4[%c0_32, %c3_33, %c0_34, %c0_35] : memref<1x4x8x128xf32, #tpu.memory_space<vmem>>, vector<1x1x8x128xf32>
    %37 = vector.shape_cast %36 : vector<1x1x8x128xf32> to vector<8x128xf32>
    %38 = vector.shape_cast %35 : vector<8x128xf32> to vector<1x1x8x128xf32>
    tpu.vector_store %arg4[%c0_32, %c3_33, %c0_34, %c0_35], %38 {strides = array<i32>} : memref<1x4x8x128xf32, #tpu.memory_space<vmem>>, vector<1x1x8x128xf32>,
    return
  }
  func.func @transform_0(%arg0: i32, %arg1: i32) -> (i32, i32) {
    %c1_i32 = arith.constant 1 : i32
    %0 = arith.muli %arg0, %c1_i32 : i32
    %1 = arith.addi %0, %arg1 : i32
    %c0_i32 = arith.constant 0 : i32
    %c0_i32_0 = arith.constant 0 : i32
    return %1, %c0_i32 : i32, i32
  }
  func.func @transform_1(%arg0: i32, %arg1: i32) -> (i32, i32) {
    %c1_i32 = arith.constant 1 : i32
    %0 = arith.muli %arg0, %c1_i32 : i32
    %1 = arith.addi %0, %arg1 : i32
    %c0_i32 = arith.constant 0 : i32
    %c0_i32_0 = arith.constant 0 : i32
    return %1, %c0_i32 : i32, i32
  }
  func.func @transform_2(%arg0: i32, %arg1: i32) -> (i32, i32, i32, i32) {
    %c0_i32 = arith.constant 0 : i32
    %c0_i32_0 = arith.constant 0 : i32
    %c0_i32_1 = arith.constant 0 : i32
    %c0_i32_2 = arith.constant 0 : i32
    return %arg0, %c0_i32, %c0_i32_0, %c0_i32_1 : i32, i32, i32, i32
  }
}

</mosaic_0001>

<llo_original>
// kernel: dice_loss_softmax.1
$region0: #{dice_loss_softmax.1}
  #allocation0 [shape = 'u32[]', space=smem, size = 0x4, offset = 0x4, fixed_abs, tag = 'smem constant byte address 0x4 - core index']
  #allocation1 [shape = 'u32[72,128]{1,0:T(1,128)}', space=vmem, size = 0x9000, scoped, tag = 'internal scratch']
  %s0 = inlined_call_operand.vmem [shape: f32[16,128], index: 0, kind: input, shape index: {}]
  %s1 = inlined_call_operand.vmem [shape: f32[16,128], index: 1, kind: input, shape index: {}]
  %s2 = inlined_call_operand.vmem [shape: f32[2,4,8,128], index: 2, kind: output, shape index: {}]
  %s3 = sld [smem:[#allocation0]]
  $region45: #{dice_loss_softmax.1} parent=0
    _
  %s5 = ssub.s32 1, %s3
  %s6 = scalar_select 0, %s5, %s3
  loop: start=0, step=1, limit=4
  $region2: #{dice_loss_softmax.1} parent=0 // loop_pre_header
    _
  $region3: #{dice_loss_softmax.1} parent=0 // loop_header
    %s8 = sphi 0, %s12
    %p9 = scmp.ge.s32.totalorder %s8, 4
    %s15 = sphi 0, %s27
    %s16 = sphi 0, %s23
    %s17 = sphi 0, %s15
    %s18 = sphi 0, %s16
    %s19 = sphi 0, %s17
    %s20 = sphi 0, %s18
    %s32 = sphi 0, %s34
    %s35 = sphi 0, %s32
    %s36 = sphi 0, %s35
    %s52 = sphi 0, %s36
    %s60 = sphi 0, %s62
    %s63 = sphi 0, %s60
    %s64 = sphi 0, %s63
    %s80 = sphi 0, %s64
    %s86 = sphi 0, %s88
    %s89 = sphi 0, %s86
    %s90 = sphi 0, %s89
    %s106 = sphi 0, %s90
  $region4: #{dice_loss_softmax.1} parent=0 // loop_header_branch
    %11 = sbr.rel (%p9) target = $region8
  $region5: #{dice_loss_softmax.1} parent=0 // loop_body
    %s13 = ssub.s32 %s8, 1
    %s14 = ssub.s32 %s8, 2
    %s21 = sadd.s32 1, %s16
    %p22 = scmp.ge.s32.totalorder %s21, 1
    %s23 = scalar_select %p22, 0, %s21
    %s24 = sadd.s32 1, %s15
    %s25 = scalar_select %p22, %s24, %s15
    %p26 = scmp.ge.s32.totalorder %s25, 2
    %s27 = scalar_select %p26, 0, %s25
    %s28 = sadd.s32 %s15, %s16
    %s29 = sadd.s32 %s27, %s23
    %s30 = ssub.s32 %s28, %s29
    %p31 = scmp.eq.s32.totalorder %s30, 0
    %s33 = sadd.s32 %s32, 1
    %s34 = scalar_select %p31, %s32, %s33
    %p37 = pneg %p31
    %p38 = scmp.eq.s32.totalorder %s8, 1
    %p39 = por %p37, %p38
    %p40 = scmp.ne.s32.totalorder %s32, %s35
    %p41 = scmp.eq.s32.totalorder %s8, 0
    %p42 = por %p40, %p41
    %p43 = scmp.ne.s32.totalorder %s32, %s35
    %p44 = scmp.eq.s32.totalorder %s13, 1
    %p45 = por %p43, %p44
    %p46 = scmp.ne.s32.totalorder %s35, %s36
    %p47 = scmp.eq.s32.totalorder %s13, 0
    %p48 = por %p46, %p47
    %p49 = scmp.ne.s32.totalorder %s35, %s36
    %p50 = scmp.eq.s32.totalorder %s14, 1
    %p51 = por %p49, %p50
    %p53 = scmp.ne.s32.totalorder %s36, %s52
    %p54 = scmp.eq.s32.totalorder %s14, 0
    %p55 = por %p53, %p54
    %s56 = sadd.s32 %s15, %s16
    %s57 = sadd.s32 %s27, %s23
    %s58 = ssub.s32 %s56, %s57
    %p59 = scmp.eq.s32.totalorder %s58, 0
    %s61 = sadd.s32 %s60, 1
    %s62 = scalar_select %p59, %s60, %s61
    %p65 = pneg %p59
    %p66 = scmp.eq.s32.totalorder %s8, 1
    %p67 = por %p65, %p66
    %p68 = scmp.ne.s32.totalorder %s60, %s63
    %p69 = scmp.eq.s32.totalorder %s8, 0
    %p70 = por %p68, %p69
    %p71 = scmp.ne.s32.totalorder %s60, %s63
    %p72 = scmp.eq.s32.totalorder %s13, 1
    %p73 = por %p71, %p72
    %p74 = scmp.ne.s32.totalorder %s63, %s64
    %p75 = scmp.eq.s32.totalorder %s13, 0
    %p76 = por %p74, %p75
    %p77 = scmp.ne.s32.totalorder %s63, %s64
    %p78 = scmp.eq.s32.totalorder %s14, 1
    %p79 = por %p77, %p78
    %p81 = scmp.ne.s32.totalorder %s64, %s80
    %p82 = scmp.eq.s32.totalorder %s14, 0
    %p83 = por %p81, %p82
    %s84 = ssub.s32 %s15, %s27
    %p85 = scmp.eq.s32.totalorder %s84, 0
    %s87 = sadd.s32 %s86, 1
    %s88 = scalar_select %p85, %s86, %s87
    %p91 = pneg %p85
    %p92 = scmp.eq.s32.totalorder %s8, 1
    %p93 = por %p91, %p92
    %p94 = scmp.ne.s32.totalorder %s86, %s89
    %p95 = scmp.eq.s32.totalorder %s8, 0
    %p96 = por %p94, %p95
    %p97 = scmp.ne.s32.totalorder %s86, %s89
    %p98 = scmp.eq.s32.totalorder %s13, 1
    %p99 = por %p97, %p98
    %p100 = scmp.ne.s32.totalorder %s89, %s90
    %p101 = scmp.eq.s32.totalorder %s13, 0
    %p102 = por %p100, %p101
    %p103 = scmp.ne.s32.totalorder %s89, %s90
    %p104 = scmp.eq.s32.totalorder %s14, 1
    %p105 = por %p103, %p104
    %p107 = scmp.ne.s32.totalorder %s90, %s106
    %p108 = scmp.eq.s32.totalorder %s14, 0
    %p109 = por %p107, %p108
    %p110 = scmp.le.s32.totalorder 1, %s8
    %p111 = scmp.lt.s32.totalorder %s8, 3
    %p112 = pnand %p110, %p111
    %p113 = pneg %p112
    // Predicated region
    $region9: #{dice_loss_softmax.1} parent=5 // pred_check
      _
    $region10: #{dice_loss_softmax.1} parent=5 // pred_check_branch
      %115 = sbr.rel (%p112) target = $region12
    $region11: #{dice_loss_softmax.1} parent=5 // pred_region
      %s116 = ssub.s32 %s8, 1
    $region12: #{dice_loss_softmax.1} parent=5 // pred_fallthru
      _
    %p117 = scmp.lt.s32.totalorder %s8, 2
    // Predicated region
    $region13: #{dice_loss_softmax.1} parent=5 // pred_check
      %p118 = pneg %p117
    $region14: #{dice_loss_softmax.1} parent=5 // pred_check_branch
      %120 = sbr.rel (%p118) target = $region16
    $region15: #{dice_loss_softmax.1} parent=5 // pred_region
      // Predicated region
      $region17: #{dice_loss_softmax.1} parent=15 // pred_check
        %p121 = pneg %p42
      $region18: #{dice_loss_softmax.1} parent=15 // pred_check_branch
        %123 = sbr.rel (%p121) target = $region20
      $region19: #{dice_loss_softmax.1} parent=15 // pred_region
        %s124 = sadd.s32 %s15, %s16
        %p125 = scmp.lt.s32.totalorder %s124, 1
        %s126 = scalar_select %p125, %s124, 1
        %s127 = smul.addr %s126, 8
        %s128 = scalar_lea.vmem %s0, %s127
        %s129 = sadd.s32 %s15, %s16
      $region20: #{dice_loss_softmax.1} parent=15 // pred_fallthru
        _
      // Predicated region
      $region21: #{dice_loss_softmax.1} parent=15 // pred_check
        %p130 = pneg %p70
      $region22: #{dice_loss_softmax.1} parent=15 // pred_check_branch
        %132 = sbr.rel (%p130) target = $region24
      $region23: #{dice_loss_softmax.1} parent=15 // pred_region
        %s133 = sadd.s32 %s15, %s16
        %p134 = scmp.lt.s32.totalorder %s133, 1
        %s135 = scalar_select %p134, %s133, 1
        %s136 = smul.addr %s135, 8
        %s137 = scalar_lea.vmem %s1, %s136
        %s138 = sadd.s32 %s15, %s16
      $region24: #{dice_loss_softmax.1} parent=15 // pred_fallthru
        _
    $region16: #{dice_loss_softmax.1} parent=5 // pred_fallthru
      _
    %p139 = scmp.le.s32.totalorder 1, %s8
    %p140 = scmp.lt.s32.totalorder %s8, 3
    %p141 = pnand %p139, %p140
    %p142 = pneg %p141
    // Predicated region
    $region25: #{dice_loss_softmax.1} parent=5 // pred_check
      _
    $region26: #{dice_loss_softmax.1} parent=5 // pred_check_branch
      %144 = sbr.rel (%p141) target = $region28
    $region27: #{dice_loss_softmax.1} parent=5 // pred_region
      %s145 = ssub.s32 %s8, 1
      %s146 = sadd.s32 %s17, %s18
      %p147 = scmp.lt.s32.totalorder %s146, 1
      %s148 = scalar_select %p147, %s146, 1
      %s149 = smul.addr %s148, 8
      %s150 = scalar_lea.vmem %s0, %s149
      %p151 = pneg %p48
      %p152 = pneg %p45
      %s153 = sadd.s32 %s17, %s18
      %p154 = scmp.lt.s32.totalorder %s153, 1
      %s155 = scalar_select %p154, %s153, 1
      %s156 = smul.addr %s155, 8
      %s157 = scalar_lea.vmem %s1, %s156
      %p158 = pneg %p76
      %p159 = pneg %p73
      %p160 = pneg %p102
      %p161 = pneg %p99
      %p162 = scmp.lt.s32.totalorder %s17, 1
      %s163 = scalar_select %p162, %s17, 1
      %s164 = smul.addr %s163, 4
      %s165 = smul.addr %s164, 8
      %s166 = scalar_lea.vmem %s2, %s165
      %s167 = sadd.s32 %s17, %s18
      %p168 = scmp.lt.s32.totalorder %s167, 1
      %s169 = scalar_select %p168, %s167, 1
      %s170 = smul.addr %s169, 8
      %s171 = scalar_lea.vmem %s0, %s170
      %s172 = sadd.s32 %s17, %s18
      %s173 = sadd.s32 %s17, %s18
      %p174 = scmp.lt.s32.totalorder %s173, 1
      %s175 = scalar_select %p174, %s173, 1
      %s176 = smul.addr %s175, 8
      %s177 = scalar_lea.vmem %s1, %s176
      %s178 = sadd.s32 %s17, %s18
      %p179 = scmp.lt.s32.totalorder %s17, 1
      %s180 = scalar_select %p179, %s17, 1
      %s181 = smul.addr %s180, 4
      %s182 = smul.addr %s181, 8
      %s183 = scalar_lea.vmem %s2, %s182
      %p184 = scmp.eq.s32.totalorder %s18, 0
      // Predicated region
      $region29: #{dice_loss_softmax.1} parent=27 // pred_check
        %p185 = pneg %p184
      $region30: #{dice_loss_softmax.1} parent=27 // pred_check_branch
        %187 = sbr.rel (%p185) target = $region32
      $region31: #{dice_loss_softmax.1} parent=27 // pred_region
        %188 = vst [vmem:[%s183] sm:$0xff] 0.0
        %189 = vst [vmem:[%s183 + $0x8] sm:$0xff] 0.0
        %190 = vst [vmem:[%s183 + $0x10] sm:$0xff] 0.0
        %191 = vst [vmem:[%s183 + $0x18] sm:$0xff] 0.0
      $region32: #{dice_loss_softmax.1} parent=27 // pred_fallthru
        _
      %v192 = vld [vmem:[%s171] sm:$0xff]
      %v193 = vld [vmem:[%s177] sm:$0xff]
      %v194 = vld [vmem:[%s183] sm:$0xff]
      %v195 = vadd.f32 %v192, 0.0
      %v196 = vadd.f32 %v194, %v195
      %197 = vst [vmem:[%s183] sm:$0xff] %v196
      %s198 = scalar_lea.vmem %s183, 8
      %v199 = vld [vmem:[%s198] sm:$0xff]
      %v200 = vmul.f32 %v192, %v192
      %v201 = vadd.f32 %v200, 0.0
      %v202 = vadd.f32 %v199, %v201
      %203 = vst [vmem:[%s198] sm:$0xff] %v202
      %s204 = scalar_lea.vmem %s183, 16
      %v205 = vld [vmem:[%s204] sm:$0xff]
      %v206 = vmul.f32 %v192, %v193
      %v207 = vadd.f32 %v206, 0.0
      %v208 = vadd.f32 %v205, %v207
      %209 = vst [vmem:[%s204] sm:$0xff] %v208
      %s210 = scalar_lea.vmem %s183, 24
      %v211 = vld [vmem:[%s210] sm:$0xff]
      %v212 = vadd.f32 %v193, 0.0
      %v213 = vadd.f32 %v211, %v212
      %214 = vst [vmem:[%s210] sm:$0xff] %v213
      %p215 = scmp.lt.s32.totalorder %s17, 1
      %s216 = scalar_select %p215, %s17, 1
      %s217 = smul.addr %s216, 4
      %s218 = smul.addr %s217, 8
      %s219 = scalar_lea.vmem %s2, %s218
      // Predicated region
      $region33: #{dice_loss_softmax.1} parent=27 // pred_check
        %p220 = pneg %p99
      $region34: #{dice_loss_softmax.1} parent=27 // pred_check_branch
        %222 = sbr.rel (%p220) target = $region36
      $region35: #{dice_loss_softmax.1} parent=27 // pred_region
        _
      $region36: #{dice_loss_softmax.1} parent=27 // pred_fallthru
        _
    $region28: #{dice_loss_softmax.1} parent=5 // pred_fallthru
      _
    %p223 = scmp.le.s32.totalorder 2, %s8
    // Predicated region
    $region37: #{dice_loss_softmax.1} parent=5 // pred_check
      %p224 = pneg %p223
    $region38: #{dice_loss_softmax.1} parent=5 // pred_check_branch
      %226 = sbr.rel (%p224) target = $region40
    $region39: #{dice_loss_softmax.1} parent=5 // pred_region
      %s227 = ssub.s32 %s8, 2
      // Predicated region
      $region41: #{dice_loss_softmax.1} parent=39 // pred_check
        %p228 = pneg %p105
      $region42: #{dice_loss_softmax.1} parent=39 // pred_check_branch
        %230 = sbr.rel (%p228) target = $region44
      $region43: #{dice_loss_softmax.1} parent=39 // pred_region
        %p231 = scmp.lt.s32.totalorder %s19, 1
        %s232 = scalar_select %p231, %s19, 1
        %s233 = smul.addr %s232, 4
        %s234 = smul.addr %s233, 8
        %s235 = scalar_lea.vmem %s2, %s234
      $region44: #{dice_loss_softmax.1} parent=39 // pred_fallthru
        _
    $region40: #{dice_loss_softmax.1} parent=5 // pred_fallthru
      _
  $region6: #{dice_loss_softmax.1} parent=0 // loop_footer
    %s12 = sadd.s32 1, %s8
  $region7: #{dice_loss_softmax.1} parent=0 // loop_footer_branch
    %7 = sbr.rel target = $region3
  $region8: #{dice_loss_softmax.1} parent=0 // loop_exit
    _

</llo_original>
